<compile_context>
chip_gen: v7x
topology: tpu7x:2x2x1
jax: 0.10.0
libtpu: 0.0.40
codegen_flags: <defaults>
</compile_context>

<pallas_src>
import functools

import jax
import jax.numpy as jnp
from jax.experimental import pallas as pl
from jax.experimental.pallas import tpu as pltpu


def _semantic_attention_kernel(h_ref, wblk_ref, bblk_ref, qblk_ref,
                               s_ref, g_ref, out_ref, *, n_rows):
    # h_ref   : (TM, R*D)  lane-dense node tile (native dtype)
    # wblk_ref: (R*D, R*A) block-diagonal W (native dtype)
    # bblk_ref: (1, R*A)   b tiled over relations (f32)
    # qblk_ref: (R*A, R)   block-diagonal q (f32)
    # s_ref   : (R, R*D)   selector: alpha -> lane-dense broadcast (f32)
    # g_ref   : (R*D, D)   gather: sum over relations (native dtype)
    # out_ref : (TM, D)
    tm = h_ref.shape[0]

    # Ragged last block: zero out rows past N so tanh/exp/softmax stay clean
    # and deterministic (OOB output writes are dropped by Pallas anyway).
    row_ids = pl.program_id(0) * tm + jax.lax.broadcasted_iota(
        jnp.int32, (tm, 1), 0)
    valid = row_ids < n_rows                                   # (TM, 1)

    h = h_ref[...]                                             # native dtype
    h = jnp.where(valid, h, jnp.zeros_like(h))                 # (TM, RD)

    # proj[n, r*A + a] = tanh(h[n, r, :] @ W + b)[a]   (f32 accumulation)
    proj = jnp.tanh(
        jnp.dot(h, wblk_ref[...], preferred_element_type=jnp.float32)
        + bblk_ref[...]
    )                                                          # (TM, RA) f32

    # Relation scores directly in (TM, R) layout.
    scores = jnp.dot(proj, qblk_ref[...],
                     preferred_element_type=jnp.float32)       # (TM, R)

    # Softmax over relations (== PyTorch dim=1).  Exact divide: the approx
    # EUP reciprocal previously exceeded the numerical tolerance.
    m = jnp.max(scores, axis=-1, keepdims=True)
    e = jnp.exp(scores - m)
    denom = jnp.sum(e, axis=-1, keepdims=True)                 # >= 1
    alpha = e / denom                                          # (TM, R) f32

    # Broadcast alpha back to the lane-dense layout and reduce over relations
    # with a matmul (no (TM,R,D) broadcast temp, no sublane reduction).
    alpha_dense = jnp.dot(alpha, s_ref[...],
                          preferred_element_type=jnp.float32)  # (TM, RD) f32
    weighted = h * alpha_dense.astype(h.dtype)                 # native dtype
    out = jnp.dot(weighted, g_ref[...],
                  preferred_element_type=jnp.float32)          # (TM, D) f32
    out_ref[...] = out.astype(out_ref.dtype)


def _round_up(x, m):
    return ((x + m - 1) // m) * m


@functools.partial(jax.jit, static_argnames=("tm",))
def semantic_attention(h, W, b, q, *, tm=4096):
    """h: (N, R, D), W: (D, A), b: (1, A), q: (A, 1) -> (N, D)."""
    N, R, D = h.shape
    A = W.shape[1]
    RD, RA = R * D, R * A

    # Lane-dense flatten: h[n, r, d] -> h2d[n, r*D + d] (C-order). dtype is
    # preserved so bf16 inputs stream over HBM at bf16 width.
    h2d = h.reshape(N, RD)

    f32 = jnp.float32
    W = W.astype(f32)
    b = b.astype(f32)
    q = q.astype(f32)
    eye_r = jnp.eye(R, dtype=f32)
    # MXU-operand params in h's dtype (single-pass bf16 when h is bf16);
    # everything touched by the f32 softmax path stays f32.
    W_blk = jnp.kron(eye_r, W).astype(h.dtype)            # (RD, RA) block-diag
    b_blk = jnp.tile(b, (1, R))                           # (1, RA)  f32
    q_blk = jnp.kron(eye_r, q)                            # (RA, R)  f32
    S = jnp.kron(eye_r, jnp.ones((1, D), f32))            # (R, RD)  f32
    G = jnp.tile(jnp.eye(D, dtype=f32), (R, 1)).astype(h.dtype)  # (RD, D)

    # Tile choice (mem-bound kernel):
    #   * big tiles amortize the ~0.35 us per-grid-step overhead,
    #   * keep >= 2 grid steps when possible so "parallel" can shard across
    #     both v7x TensorCores,
    #   * VMEM-aware cap (~4 MiB per h buffer) so double-buffering + output
    #     stays well inside the scoped VMEM defaults on v5e/v6e/v7x,
    #   * no wrapper-side padding — the ragged last block is masked in-kernel.
    half = _round_up(max(1, -(-N // 2)), 8)
    bytes_per_row = RD * jnp.dtype(h.dtype).itemsize
    cap_rows = max(8, ((4 << 20) // max(1, bytes_per_row)) // 8 * 8)
    tm_eff = max(8, min(tm, half, cap_rows))
    grid = (pl.cdiv(N, tm_eff),)

    kernel = functools.partial(_semantic_attention_kernel, n_rows=N)

    out = pl.pallas_call(
        kernel,
        out_shape=jax.ShapeDtypeStruct((N, D), h.dtype),
        grid_spec=pltpu.PrefetchScalarGridSpec(
            num_scalar_prefetch=0,
            grid=grid,
            in_specs=[
                pl.BlockSpec((tm_eff, RD), lambda i: (i, 0)),   # h tile
                pl.BlockSpec((RD, RA), lambda i: (0, 0)),       # W_blk (resident)
                pl.BlockSpec((1, RA), lambda i: (0, 0)),        # b_blk (resident)
                pl.BlockSpec((RA, R), lambda i: (0, 0)),        # q_blk (resident)
                pl.BlockSpec((R, RD), lambda i: (0, 0)),        # S     (resident)
                pl.BlockSpec((RD, D), lambda i: (0, 0)),        # G     (resident)
            ],
            out_specs=pl.BlockSpec((tm_eff, D), lambda i: (i, 0)),
        ),
        compiler_params=pltpu.CompilerParams(
            dimension_semantics=("parallel",),
        ),
    )(h2d, W_blk, b_blk, q_blk, S, G)
    return out


def _xavier_uniform(key, shape, dtype=jnp.float32):
    fan_in, fan_out = shape[0], shape[1]
    limit = jnp.sqrt(6.0 / (fan_in + fan_out))
    return jax.random.uniform(key, shape, dtype, minval=-limit, maxval=limit)


def _reference(h, W, b, q):
    w = jnp.tanh(jnp.matmul(h, W) + b)       # (N, R, A)
    w = jnp.matmul(w, q)                     # (N, R, 1)
    alpha = jax.nn.softmax(w, axis=1)        # softmax over relations
    return jnp.sum(alpha * h, axis=1)        # (N, D)


if __name__ == "__main__":
    # Small, module-consistent shapes; N deliberately not a multiple of the
    # tile to exercise the ragged last-block (masked) path.
    num_relations = 4      # R
    in_dim = 32            # D (embed_dim)
    dim_a = 16             # A
    num_nodes = 250        # N

    key = jax.random.PRNGKey(0)
    k_h, k_w, k_q = jax.random.split(key, 3)

    h = jax.random.normal(k_h, (num_nodes, num_relations, in_dim), jnp.float32)
    W = _xavier_uniform(k_w, (in_dim, dim_a))
    b = jnp.zeros((1, dim_a), jnp.float32)             # nn.Parameter(zeros)
    q = _xavier_uniform(k_q, (dim_a, 1))

    out = semantic_attention(h, W, b, q)
    out = jax.block_until_ready(out)

    ref = _reference(h, W, b, q)
    assert out.shape == (num_nodes, in_dim)
    max_err = float(jnp.max(jnp.abs(out - ref)))
    assert jnp.allclose(out, ref, atol=2e-3, rtol=2e-3), max_err
    print("KERNEL_OK")
</pallas_src>

<mosaic_0001>
module attributes {stable_mosaic.version = 11 : i64} {
  func.func @_semantic_attention_kernel(%arg0: i32, %arg1: memref<128x128xf32, #tpu.memory_space<vmem>>, %arg2: memref<128x64xf32, #tpu.memory_space<vmem>>, %arg3: memref<1x64xf32, #tpu.memory_space<vmem>>, %arg4: memref<64x4xf32, #tpu.memory_space<vmem>>, %arg5: memref<4x128xf32, #tpu.memory_space<vmem>>, %arg6: memref<128x32xf32, #tpu.memory_space<vmem>>, %arg7: memref<128x32xf32, #tpu.memory_space<vmem>>) attributes {dimension_semantics = [#tpu.dimension_semantics<parallel>], iteration_bounds = array<i64: 2>, scalar_prefetch = 0 : i64, scratch_operands = 0 : i64, tpu.core_type = #tpu.core_type<tc>, window_params = [{transform_indices = @transform_0, window_bounds = array<i64: 128, 128>}, {pipeline_mode = #tpu.pipeline_mode<synchronous>, transform_indices = @transform_1, window_bounds = array<i64: 128, 64>}, {pipeline_mode = #tpu.pipeline_mode<synchronous>, transform_indices = @transform_2, window_bounds = array<i64: 1, 64>}, {pipeline_mode = #tpu.pipeline_mode<synchronous>, transform_indices = @transform_3, window_bounds = array<i64: 64, 4>}, {pipeline_mode = #tpu.pipeline_mode<synchronous>, transform_indices = @transform_4, window_bounds = array<i64: 4, 128>}, {pipeline_mode = #tpu.pipeline_mode<synchronous>, transform_indices = @transform_5, window_bounds = array<i64: 128, 32>}, {transform_indices = @transform_6, window_bounds = array<i64: 128, 32>}]} {
    %c128_i32 = arith.constant 128 : i32
    %0 = arith.muli %arg0, %c128_i32 : i32
    %1 = tpu.iota {dimensions = array<i32: 0>} : vector<128x1xi32>
    %2 = vector.broadcast %0 : i32 to vector<128x1xi32>
    %3 = arith.addi %2, %1 : vector<128x1xi32>
    %c250_i32 = arith.constant 250 : i32
    %4 = vector.broadcast %c250_i32 : i32 to vector<128x1xi32>
    %5 = arith.cmpi slt, %3, %4 : vector<128x1xi32>
    %c0 = arith.constant 0 : index
    %c0_0 = arith.constant 0 : index
    %6 = vector.load %arg1[%c0, %c0_0] : memref<128x128xf32, #tpu.memory_space<vmem>>, vector<128x128xf32>
    %cst = arith.constant 0.000000e+00 : f32
    %7 = vector.broadcast %cst : f32 to vector<128x128xf32>
    %8 = vector.shape_cast %5 : vector<128x1xi1> to vector<128x1xi1>
    %9 = vector.broadcast %8 : vector<128x1xi1> to vector<128x128xi1>
    %10 = arith.select %9, %6, %7 : vector<128x128xi1>, vector<128x128xf32>
    %c0_1 = arith.constant 0 : index
    %c0_2 = arith.constant 0 : index
    %11 = vector.load %arg2[%c0_1, %c0_2] : memref<128x64xf32, #tpu.memory_space<vmem>>, vector<128x64xf32>
    %cst_3 = arith.constant dense<0.000000e+00> : vector<128x64xf32>
    %12 = tpu.matmul %10, %11, %cst_3 {dimension_numbers = #tpu.dot_dimension_numbers<[1], [0], [0], [1], [0, 0, 1, 1], [], []>} : vector<128x128xf32>, vector<128x64xf32>, vector<128x64xf32> -> vector<128x64xf32>
    %c0_4 = arith.constant 0 : index
    %c0_5 = arith.constant 0 : index
    %13 = vector.load %arg3[%c0_4, %c0_5] : memref<1x64xf32, #tpu.memory_space<vmem>>, vector<1x64xf32>
    %14 = vector.broadcast %13 : vector<1x64xf32> to vector<128x64xf32>
    %15 = arith.addf %12, %14 : vector<128x64xf32>
    %16 = math.tanh %15 : vector<128x64xf32>
    %c0_6 = arith.constant 0 : index
    %c0_7 = arith.constant 0 : index
    %17 = vector.load %arg4[%c0_6, %c0_7] : memref<64x4xf32, #tpu.memory_space<vmem>>, vector<64x4xf32>
    %cst_8 = arith.constant dense<0.000000e+00> : vector<128x4xf32>
    %18 = tpu.matmul %16, %17, %cst_8 {dimension_numbers = #tpu.dot_dimension_numbers<[1], [0], [0], [1], [0, 0, 1, 1], [], []>} : vector<128x64xf32>, vector<64x4xf32>, vector<128x4xf32> -> vector<128x4xf32>
    %cst_9 = arith.constant dense<0xFF800000> : vector<128xf32>
    %19 = vector.multi_reduction <maximumf>, %18, %cst_9 [1] : vector<128x4xf32> to vector<128xf32>
    %20 = vector.shape_cast %19 : vector<128xf32> to vector<128x1xf32>
    %21 = vector.broadcast %20 : vector<128x1xf32> to vector<128x4xf32>
    %22 = arith.subf %18, %21 : vector<128x4xf32>
    %23 = math.exp %22 : vector<128x4xf32>
    %cst_10 = arith.constant dense<0.000000e+00> : vector<128xf32>
    %24 = vector.multi_reduction <add>, %23, %cst_10 [1] : vector<128x4xf32> to vector<128xf32>
    %25 = vector.shape_cast %24 : vector<128xf32> to vector<128x1xf32>
    %26 = vector.broadcast %25 : vector<128x1xf32> to vector<128x4xf32>
    %27 = arith.divf %23, %26 : vector<128x4xf32>
    %c0_11 = arith.constant 0 : index
    %c0_12 = arith.constant 0 : index
    %28 = vector.load %arg5[%c0_11, %c0_12] : memref<4x128xf32, #tpu.memory_space<vmem>>, vector<4x128xf32>
    %cst_13 = arith.constant dense<0.000000e+00> : vector<128x128xf32>
    %29 = tpu.matmul %27, %28, %cst_13 {dimension_numbers = #tpu.dot_dimension_numbers<[1], [0], [0], [1], [0, 0, 1, 1], [], []>} : vector<128x4xf32>, vector<4x128xf32>, vector<128x128xf32> -> vector<128x128xf32>
    %30 = arith.mulf %10, %29 : vector<128x128xf32>
    %c0_14 = arith.constant 0 : index
    %c0_15 = arith.constant 0 : index
    %31 = vector.load %arg6[%c0_14, %c0_15] : memref<128x32xf32, #tpu.memory_space<vmem>>, vector<128x32xf32>
    %cst_16 = arith.constant dense<0.000000e+00> : vector<128x32xf32>
    %32 = tpu.matmul %30, %31, %cst_16 {dimension_numbers = #tpu.dot_dimension_numbers<[1], [0], [0], [1], [0, 0, 1, 1], [], []>} : vector<128x128xf32>, vector<128x32xf32>, vector<128x32xf32> -> vector<128x32xf32>
    %c0_17 = arith.constant 0 : index
    %c0_18 = arith.constant 0 : index
    %33 = vector.load %arg7[%c0_17, %c0_18] : memref<128x32xf32, #tpu.memory_space<vmem>>, vector<128x32xf32>
    tpu.vector_store %arg7[%c0_17, %c0_18], %32 {strides = array<i32>} : memref<128x32xf32, #tpu.memory_space<vmem>>, vector<128x32xf32>,
    return
  }
  func.func @transform_0(%arg0: i32) -> (i32, i32) {
    %c0_i32 = arith.constant 0 : i32
    %c0_i32_0 = arith.constant 0 : i32
    return %arg0, %c0_i32 : i32, i32
  }
  func.func @transform_1(%arg0: i32) -> (i32, i32) {
    %c0_i32 = arith.constant 0 : i32
    %c0_i32_0 = arith.constant 0 : i32
    %c0_i32_1 = arith.constant 0 : i32
    return %c0_i32, %c0_i32_0 : i32, i32
  }
  func.func @transform_2(%arg0: i32) -> (i32, i32) {
    %c0_i32 = arith.constant 0 : i32
    %c0_i32_0 = arith.constant 0 : i32
    %c0_i32_1 = arith.constant 0 : i32
    return %c0_i32, %c0_i32_0 : i32, i32
  }
  func.func @transform_3(%arg0: i32) -> (i32, i32) {
    %c0_i32 = arith.constant 0 : i32
    %c0_i32_0 = arith.constant 0 : i32
    %c0_i32_1 = arith.constant 0 : i32
    return %c0_i32, %c0_i32_0 : i32, i32
  }
  func.func @transform_4(%arg0: i32) -> (i32, i32) {
    %c0_i32 = arith.constant 0 : i32
    %c0_i32_0 = arith.constant 0 : i32
    %c0_i32_1 = arith.constant 0 : i32
    return %c0_i32, %c0_i32_0 : i32, i32
  }
  func.func @transform_5(%arg0: i32) -> (i32, i32) {
    %c0_i32 = arith.constant 0 : i32
    %c0_i32_0 = arith.constant 0 : i32
    %c0_i32_1 = arith.constant 0 : i32
    return %c0_i32, %c0_i32_0 : i32, i32
  }
  func.func @transform_6(%arg0: i32) -> (i32, i32) {
    %c0_i32 = arith.constant 0 : i32
    %c0_i32_0 = arith.constant 0 : i32
    return %arg0, %c0_i32 : i32, i32
  }
}

</mosaic_0001>

<llo_original>
// kernel: semantic_attention.1
$region0: #{semantic_attention.1}
  #allocation0 [shape = 'u32[]', space=smem, size = 0x4, offset = 0x4, fixed_abs, tag = 'smem constant byte address 0x4 - core index']
  #allocation1 [shape = 'u32[144,128]{1,0:T(1,128)}', space=vmem, size = 0x12000, scoped, tag = 'internal scratch']
  %s0 = inlined_call_operand.vmem [shape: f32[250,128], index: 0, kind: input, shape index: {}]
  %s1 = inlined_call_operand.vmem [shape: f32[128,64], index: 1, kind: input, shape index: {}]
  %s2 = inlined_call_operand.vmem [shape: f32[1,64], index: 2, kind: input, shape index: {}]
  %s3 = inlined_call_operand.vmem [shape: f32[64,4], index: 3, kind: input, shape index: {}]
  %s4 = inlined_call_operand.vmem [shape: f32[4,128], index: 4, kind: input, shape index: {}]
  %s5 = inlined_call_operand.vmem [shape: f32[128,32], index: 5, kind: input, shape index: {}]
  %s6 = inlined_call_operand.vmem [shape: f32[250,32], index: 6, kind: output, shape index: {}]
  %s7 = sld [smem:[#allocation0]]
  $region57: #{semantic_attention.1} parent=0
    _
  %s9 = ssub.s32 1, %s7
  %s10 = scalar_select 0, %s9, %s7
  loop: start=0, step=1, limit=4
  $region2: #{semantic_attention.1} parent=0 // loop_pre_header
    _
  $region3: #{semantic_attention.1} parent=0 // loop_header
    %s12 = sphi 0, %s16
    %p13 = scmp.ge.s32.totalorder %s12, 4
    %s22 = sphi 0, %s24
    %s25 = sphi 0, %s22
    %s26 = sphi 0, %s25
    %s42 = sphi 0, %s26
    %s46 = sphi 0, %s46
    %s48 = sphi 0, %s46
    %s49 = sphi 0, %s48
    %s63 = sphi 0, %s49
    %s67 = sphi 0, %s67
    %s69 = sphi 0, %s67
    %s70 = sphi 0, %s69
    %s84 = sphi 0, %s70
    %s88 = sphi 0, %s88
    %s90 = sphi 0, %s88
    %s91 = sphi 0, %s90
    %s105 = sphi 0, %s91
    %s109 = sphi 0, %s109
    %s111 = sphi 0, %s109
    %s112 = sphi 0, %s111
    %s126 = sphi 0, %s112
    %s130 = sphi 0, %s130
    %s132 = sphi 0, %s130
    %s133 = sphi 0, %s132
    %s147 = sphi 0, %s133
    %s153 = sphi 0, %s155
    %s156 = sphi 0, %s153
    %s157 = sphi 0, %s156
    %s173 = sphi 0, %s157
  $region4: #{semantic_attention.1} parent=0 // loop_header_branch
    %15 = sbr.rel (%p13) target = $region8
  $region5: #{semantic_attention.1} parent=0 // loop_body
    %s17 = ssub.s32 %s12, 1
    %s18 = ssub.s32 %s12, 2
    %s19 = sadd.s32 %s12, 1
    %s20 = ssub.s32 %s12, %s19
    %p21 = scmp.eq.s32.totalorder %s20, 0
    %s23 = sadd.s32 %s22, 1
    %s24 = scalar_select %p21, %s22, %s23
    %p27 = pneg %p21
    %p28 = scmp.eq.s32.totalorder %s12, 1
    %p29 = por %p27, %p28
    %p30 = scmp.ne.s32.totalorder %s22, %s25
    %p31 = scmp.eq.s32.totalorder %s12, 0
    %p32 = por %p30, %p31
    %p33 = scmp.ne.s32.totalorder %s22, %s25
    %p34 = scmp.eq.s32.totalorder %s17, 1
    %p35 = por %p33, %p34
    %p36 = scmp.ne.s32.totalorder %s25, %s26
    %p37 = scmp.eq.s32.totalorder %s17, 0
    %p38 = por %p36, %p37
    %p39 = scmp.ne.s32.totalorder %s25, %s26
    %p40 = scmp.eq.s32.totalorder %s18, 1
    %p41 = por %p39, %p40
    %p43 = scmp.ne.s32.totalorder %s26, %s42
    %p44 = scmp.eq.s32.totalorder %s18, 0
    %p45 = por %p43, %p44
    %s47 = sadd.s32 %s46, 1
    %p50 = scmp.eq.s32.totalorder %s12, 1
    %p51 = scmp.ne.s32.totalorder %s46, %s48
    %p52 = scmp.eq.s32.totalorder %s12, 0
    %p53 = por %p51, %p52
    %p54 = scmp.ne.s32.totalorder %s46, %s48
    %p55 = scmp.eq.s32.totalorder %s17, 1
    %p56 = por %p54, %p55
    %p57 = scmp.ne.s32.totalorder %s48, %s49
    %p58 = scmp.eq.s32.totalorder %s17, 0
    %p59 = por %p57, %p58
    %p60 = scmp.ne.s32.totalorder %s48, %s49
    %p61 = scmp.eq.s32.totalorder %s18, 1
    %p62 = por %p60, %p61
    %p64 = scmp.ne.s32.totalorder %s49, %s63
    %p65 = scmp.eq.s32.totalorder %s18, 0
    %p66 = por %p64, %p65
    %s68 = sadd.s32 %s67, 1
    %p71 = scmp.eq.s32.totalorder %s12, 1
    %p72 = scmp.ne.s32.totalorder %s67, %s69
    %p73 = scmp.eq.s32.totalorder %s12, 0
    %p74 = por %p72, %p73
    %p75 = scmp.ne.s32.totalorder %s67, %s69
    %p76 = scmp.eq.s32.totalorder %s17, 1
    %p77 = por %p75, %p76
    %p78 = scmp.ne.s32.totalorder %s69, %s70
    %p79 = scmp.eq.s32.totalorder %s17, 0
    %p80 = por %p78, %p79
    %p81 = scmp.ne.s32.totalorder %s69, %s70
    %p82 = scmp.eq.s32.totalorder %s18, 1
    %p83 = por %p81, %p82
    %p85 = scmp.ne.s32.totalorder %s70, %s84
    %p86 = scmp.eq.s32.totalorder %s18, 0
    %p87 = por %p85, %p86
    %s89 = sadd.s32 %s88, 1
    %p92 = scmp.eq.s32.totalorder %s12, 1
    %p93 = scmp.ne.s32.totalorder %s88, %s90
    %p94 = scmp.eq.s32.totalorder %s12, 0
    %p95 = por %p93, %p94
    %p96 = scmp.ne.s32.totalorder %s88, %s90
    %p97 = scmp.eq.s32.totalorder %s17, 1
    %p98 = por %p96, %p97
    %p99 = scmp.ne.s32.totalorder %s90, %s91
    %p100 = scmp.eq.s32.totalorder %s17, 0
    %p101 = por %p99, %p100
    %p102 = scmp.ne.s32.totalorder %s90, %s91
    %p103 = scmp.eq.s32.totalorder %s18, 1
    %p104 = por %p102, %p103
    %p106 = scmp.ne.s32.totalorder %s91, %s105
    %p107 = scmp.eq.s32.totalorder %s18, 0
    %p108 = por %p106, %p107
    %s110 = sadd.s32 %s109, 1
    %p113 = scmp.eq.s32.totalorder %s12, 1
    %p114 = scmp.ne.s32.totalorder %s109, %s111
    %p115 = scmp.eq.s32.totalorder %s12, 0
    %p116 = por %p114, %p115
    %p117 = scmp.ne.s32.totalorder %s109, %s111
    %p118 = scmp.eq.s32.totalorder %s17, 1
    %p119 = por %p117, %p118
    %p120 = scmp.ne.s32.totalorder %s111, %s112
    %p121 = scmp.eq.s32.totalorder %s17, 0
    %p122 = por %p120, %p121
    %p123 = scmp.ne.s32.totalorder %s111, %s112
    %p124 = scmp.eq.s32.totalorder %s18, 1
    %p125 = por %p123, %p124
    %p127 = scmp.ne.s32.totalorder %s112, %s126
    %p128 = scmp.eq.s32.totalorder %s18, 0
    %p129 = por %p127, %p128
    %s131 = sadd.s32 %s130, 1
    %p134 = scmp.eq.s32.totalorder %s12, 1
    %p135 = scmp.ne.s32.totalorder %s130, %s132
    %p136 = scmp.eq.s32.totalorder %s12, 0
    %p137 = por %p135, %p136
    %p138 = scmp.ne.s32.totalorder %s130, %s132
    %p139 = scmp.eq.s32.totalorder %s17, 1
    %p140 = por %p138, %p139
    %p141 = scmp.ne.s32.totalorder %s132, %s133
    %p142 = scmp.eq.s32.totalorder %s17, 0
    %p143 = por %p141, %p142
    %p144 = scmp.ne.s32.totalorder %s132, %s133
    %p145 = scmp.eq.s32.totalorder %s18, 1
    %p146 = por %p144, %p145
    %p148 = scmp.ne.s32.totalorder %s133, %s147
    %p149 = scmp.eq.s32.totalorder %s18, 0
    %p150 = por %p148, %p149
    %s151 = ssub.s32 %s12, %s19
    %p152 = scmp.eq.s32.totalorder %s151, 0
    %s154 = sadd.s32 %s153, 1
    %s155 = scalar_select %p152, %s153, %s154
    %p158 = pneg %p152
    %p159 = scmp.eq.s32.totalorder %s12, 1
    %p160 = por %p158, %p159
    %p161 = scmp.ne.s32.totalorder %s153, %s156
    %p162 = scmp.eq.s32.totalorder %s12, 0
    %p163 = por %p161, %p162
    %p164 = scmp.ne.s32.totalorder %s153, %s156
    %p165 = scmp.eq.s32.totalorder %s17, 1
    %p166 = por %p164, %p165
    %p167 = scmp.ne.s32.totalorder %s156, %s157
    %p168 = scmp.eq.s32.totalorder %s17, 0
    %p169 = por %p167, %p168
    %p170 = scmp.ne.s32.totalorder %s156, %s157
    %p171 = scmp.eq.s32.totalorder %s18, 1
    %p172 = por %p170, %p171
    %p174 = scmp.ne.s32.totalorder %s157, %s173
    %p175 = scmp.eq.s32.totalorder %s18, 0
    %p176 = por %p174, %p175
    %p177 = scmp.le.s32.totalorder 1, %s12
    %p178 = scmp.lt.s32.totalorder %s12, 3
    %p179 = pnand %p177, %p178
    %p180 = pneg %p179
    // Predicated region
    $region9: #{semantic_attention.1} parent=5 // pred_check
      _
    $region10: #{semantic_attention.1} parent=5 // pred_check_branch
      %182 = sbr.rel (%p179) target = $region12
    $region11: #{semantic_attention.1} parent=5 // pred_region
      %s183 = ssub.s32 %s12, 1
      // Predicated region
      $region13: #{semantic_attention.1} parent=11 // pred_check
        %p184 = pneg %p59
      $region14: #{semantic_attention.1} parent=11 // pred_check_branch
        %186 = sbr.rel (%p184) target = $region16
      $region15: #{semantic_attention.1} parent=11 // pred_region
        _
      $region16: #{semantic_attention.1} parent=11 // pred_fallthru
        _
      // Predicated region
      $region17: #{semantic_attention.1} parent=11 // pred_check
        %p187 = pneg %p80
      $region18: #{semantic_attention.1} parent=11 // pred_check_branch
        %189 = sbr.rel (%p187) target = $region20
      $region19: #{semantic_attention.1} parent=11 // pred_region
        _
      $region20: #{semantic_attention.1} parent=11 // pred_fallthru
        _
      // Predicated region
      $region21: #{semantic_attention.1} parent=11 // pred_check
        %p190 = pneg %p101
      $region22: #{semantic_attention.1} parent=11 // pred_check_branch
        %192 = sbr.rel (%p190) target = $region24
      $region23: #{semantic_attention.1} parent=11 // pred_region
        _
      $region24: #{semantic_attention.1} parent=11 // pred_fallthru
        _
      // Predicated region
      $region25: #{semantic_attention.1} parent=11 // pred_check
        %p193 = pneg %p122
      $region26: #{semantic_attention.1} parent=11 // pred_check_branch
        %195 = sbr.rel (%p193) target = $region28
      $region27: #{semantic_attention.1} parent=11 // pred_region
        _
      $region28: #{semantic_attention.1} parent=11 // pred_fallthru
        _
      // Predicated region
      $region29: #{semantic_attention.1} parent=11 // pred_check
        %p196 = pneg %p143
      $region30: #{semantic_attention.1} parent=11 // pred_check_branch
        %198 = sbr.rel (%p196) target = $region32
      $region31: #{semantic_attention.1} parent=11 // pred_region
        _
      $region32: #{semantic_attention.1} parent=11 // pred_fallthru
        _
    $region12: #{semantic_attention.1} parent=5 // pred_fallthru
      _
    %p199 = scmp.lt.s32.totalorder %s12, 2
    // Predicated region
    $region33: #{semantic_attention.1} parent=5 // pred_check
      %p200 = pneg %p199
    $region34: #{semantic_attention.1} parent=5 // pred_check_branch
      %202 = sbr.rel (%p200) target = $region36
    $region35: #{semantic_attention.1} parent=5 // pred_region
      // Predicated region
      $region37: #{semantic_attention.1} parent=35 // pred_check
        %p203 = pneg %p32
      $region38: #{semantic_attention.1} parent=35 // pred_check_branch
        %205 = sbr.rel (%p203) target = $region40
      $region39: #{semantic_attention.1} parent=35 // pred_region
        %s206 = smul.u32 16, %s12
        %p207 = scmp.lt.s32.totalorder %s206, 31
        %s208 = scalar_select %p207, %s206, 31
        %s209 = smul.addr %s208, 8
        %s210 = scalar_lea.vmem %s0, %s209
        %s211 = smul.u32 16, %s12
      $region40: #{semantic_attention.1} parent=35 // pred_fallthru
        _
    $region36: #{semantic_attention.1} parent=5 // pred_fallthru
      _
    %p212 = scmp.le.s32.totalorder 1, %s12
    %p213 = scmp.lt.s32.totalorder %s12, 3
    %p214 = pnand %p212, %p213
    %p215 = pneg %p214
    // Predicated region
    $region41: #{semantic_attention.1} parent=5 // pred_check
      _
    $region42: #{semantic_attention.1} parent=5 // pred_check_branch
      %217 = sbr.rel (%p214) target = $region44
    $region43: #{semantic_attention.1} parent=5 // pred_region
      %s218 = ssub.s32 %s12, 1
      %s219 = smul.u32 16, %s17
      %p220 = scmp.lt.s32.totalorder %s219, 31
      %s221 = scalar_select %p220, %s219, 31
      %s222 = smul.addr %s221, 8
      %s223 = scalar_lea.vmem %s0, %s222
      %p224 = pneg %p38
      %p225 = pneg %p35
      %p226 = pneg %p59
      %p227 = pneg %p56
      %p228 = pneg %p80
      %p229 = pneg %p77
      %p230 = pneg %p101
      %p231 = pneg %p98
      %p232 = pneg %p122
      %p233 = pneg %p119
      %p234 = pneg %p143
      %p235 = pneg %p140
      %p236 = pneg %p169
      %p237 = pneg %p166
      %s238 = smul.u32 16, %s17
      %p239 = scmp.lt.s32.totalorder %s238, 31
      %s240 = scalar_select %p239, %s238, 31
      %s241 = smul.addr %s240, 8
      %s242 = scalar_lea.vmem %s6, %s241
      %s243 = smul.u32 16, %s17
      %p244 = scmp.lt.s32.totalorder %s243, 31
      %s245 = scalar_select %p244, %s243, 31
      %s246 = smul.addr %s245, 8
      %s247 = scalar_lea.vmem %s0, %s246
      %s248 = smul.u32 16, %s17
      %s249 = smul.u32 16, %s17
      %p250 = scmp.lt.s32.totalorder %s249, 31
      %s251 = scalar_select %p250, %s249, 31
      %s252 = smul.addr %s251, 8
      %s253 = scalar_lea.vmem %s6, %s252
      %s254 = smul.u32 16, %s17
      %s255 = smul.u32 %s17, 128
      %v256 = vlaneseq
      %v257 = vshrl.u32 %v256, 7
      %v258 = vadd.s32 %v257, 8
      %v259 = vadd.s32 %v257, 16
      %v260 = vadd.s32 %v257, 24
      %v261 = vadd.s32 %v257, 32
      %v262 = vadd.s32 %v257, 40
      %v263 = vadd.s32 %v257, 48
      %v264 = vadd.s32 %v257, 56
      %v265 = vadd.s32 %v257, 64
      %v266 = vadd.s32 %v257, 72
      %v267 = vadd.s32 %v257, 80
      %v268 = vadd.s32 %v257, 88
      %v269 = vadd.s32 %v257, 96
      %v270 = vadd.s32 %v257, 104
      %v271 = vadd.s32 %v257, 112
      %v272 = vadd.s32 %v257, 120
      %v273 = vstv %s255
      %v274 = vadd.s32 %v273, %v257
      %v275 = vadd.s32 %v273, %v258
      %v276 = vadd.s32 %v273, %v259
      %v277 = vadd.s32 %v273, %v260
      %v278 = vadd.s32 %v273, %v261
      %v279 = vadd.s32 %v273, %v262
      %v280 = vadd.s32 %v273, %v263
      %v281 = vadd.s32 %v273, %v264
      %v282 = vadd.s32 %v273, %v265
      %v283 = vadd.s32 %v273, %v266
      %v284 = vadd.s32 %v273, %v267
      %v285 = vadd.s32 %v273, %v268
      %v286 = vadd.s32 %v273, %v269
      %v287 = vadd.s32 %v273, %v270
      %v288 = vadd.s32 %v273, %v271
      %v289 = vadd.s32 %v273, %v272
      %vm290 = vcmp.lt.s32.totalorder %v274, 250
      %vm291 = vcmp.lt.s32.totalorder %v275, 250
      %vm292 = vcmp.lt.s32.totalorder %v276, 250
      %vm293 = vcmp.lt.s32.totalorder %v277, 250
      %vm294 = vcmp.lt.s32.totalorder %v278, 250
      %vm295 = vcmp.lt.s32.totalorder %v279, 250
      %vm296 = vcmp.lt.s32.totalorder %v280, 250
      %vm297 = vcmp.lt.s32.totalorder %v281, 250
      %vm298 = vcmp.lt.s32.totalorder %v282, 250
      %vm299 = vcmp.lt.s32.totalorder %v283, 250
      %vm300 = vcmp.lt.s32.totalorder %v284, 250
      %vm301 = vcmp.lt.s32.totalorder %v285, 250
      %vm302 = vcmp.lt.s32.totalorder %v286, 250
      %vm303 = vcmp.lt.s32.totalorder %v287, 250
      %vm304 = vcmp.lt.s32.totalorder %v288, 250
      %vm305 = vcmp.lt.s32.totalorder %v289, 250
      %v306 = vld [vmem:[%s247] sm:$0xff]
      %v307 = vld [vmem:[%s247 + $0x8] sm:$0xff]
      %v308 = vld [vmem:[%s247 + $0x10] sm:$0xff]
      %v309 = vld [vmem:[%s247 + $0x18] sm:$0xff]
      %v310 = vld [vmem:[%s247 + $0x20] sm:$0xff]
      %v311 = vld [vmem:[%s247 + $0x28] sm:$0xff]
      %v312 = vld [vmem:[%s247 + $0x30] sm:$0xff]
      %v313 = vld [vmem:[%s247 + $0x38] sm:$0xff]
      %v314 = vld [vmem:[%s247 + $0x40] sm:$0xff]
      %v315 = vld [vmem:[%s247 + $0x48] sm:$0xff]
      %v316 = vld [vmem:[%s247 + $0x50] sm:$0xff]
      %v317 = vld [vmem:[%s247 + $0x58] sm:$0xff]
      %v318 = vld [vmem:[%s247 + $0x60] sm:$0xff]
      %v319 = vld [vmem:[%s247 + $0x68] sm:$0xff]
      %v320 = vld [vmem:[%s247 + $0x70] sm:$0xff]
      %v321 = vld [vmem:[%s247 + $0x78] sm:$0xff]
      %v322 = vsel %vm290, 1, 0
      %v323 = vsel %vm291, 1, 0
      %v324 = vsel %vm292, 1, 0
      %v325 = vsel %vm293, 1, 0
      %v326 = vsel %vm294, 1, 0
      %v327 = vsel %vm295, 1, 0
      %v328 = vsel %vm296, 1, 0
      %v329 = vsel %vm297, 1, 0
      %v330 = vsel %vm298, 1, 0
      %v331 = vsel %vm299, 1, 0
      %v332 = vsel %vm300, 1, 0
      %v333 = vsel %vm301, 1, 0
      %v334 = vsel %vm302, 1, 0
      %v335 = vsel %vm303, 1, 0
      %v336 = vsel %vm304, 1, 0
      %v337 = vsel %vm305, 1, 0
      %vm338 = vcmp.eq.s32.totalorder %v322, 1
      %vm339 = vcmp.eq.s32.totalorder %v323, 1
      %vm340 = vcmp.eq.s32.totalorder %v324, 1
      %vm341 = vcmp.eq.s32.totalorder %v325, 1
      %vm342 = vcmp.eq.s32.totalorder %v326, 1
      %vm343 = vcmp.eq.s32.totalorder %v327, 1
      %vm344 = vcmp.eq.s32.totalorder %v328, 1
      %vm345 = vcmp.eq.s32.totalorder %v329, 1
      %vm346 = vcmp.eq.s32.totalorder %v330, 1
      %vm347 = vcmp.eq.s32.totalorder %v331, 1
      %vm348 = vcmp.eq.s32.totalorder %v332, 1
      %vm349 = vcmp.eq.s32.totalorder %v333, 1
      %vm350 = vcmp.eq.s32.totalorder %v334, 1
      %vm351 = vcmp.eq.s32.totalorder %v335, 1
      %vm352 = vcmp.eq.s32.totalorder %v336, 1
      %vm353 = vcmp.eq.s32.totalorder %v337, 1
      %v354 = vsel %vm338, %v306, 0.0
      %v355 = vsel %vm339, %v307, 0.0
      %v356 = vsel %vm340, %v308, 0.0
      %v357 = vsel %vm341, %v309, 0.0
      %v358 = vsel %vm342, %v310, 0.0
      %v359 = vsel %vm343, %v311, 0.0
      %v360 = vsel %vm344, %v312, 0.0
      %v361 = vsel %vm345, %v313, 0.0
      %v362 = vsel %vm346, %v314, 0.0
      %v363 = vsel %vm347, %v315, 0.0
      %v364 = vsel %vm348, %v316, 0.0
      %v365 = vsel %vm349, %v317, 0.0
      %v366 = vsel %vm350, %v318, 0.0
      %v367 = vsel %vm351, %v319, 0.0
      %v368 = vsel %vm352, %v320, 0.0
      %v369 = vsel %vm353, %v321, 0.0
      %v370 = vld [vmem:[%s1] sm:$0xff]
      %v371 = vld [vmem:[%s1 + $0x8] sm:$0xff]
      %v372 = vld [vmem:[%s1 + $0x10] sm:$0xff]
      %v373 = vld [vmem:[%s1 + $0x18] sm:$0xff]
      %v374 = vld [vmem:[%s1 + $0x20] sm:$0xff]
      %v375 = vld [vmem:[%s1 + $0x28] sm:$0xff]
      %v376 = vld [vmem:[%s1 + $0x30] sm:$0xff]
      %v377 = vld [vmem:[%s1 + $0x38] sm:$0xff]
      %v378 = vld [vmem:[%s1 + $0x40] sm:$0xff]
      %v379 = vld [vmem:[%s1 + $0x48] sm:$0xff]
      %v380 = vld [vmem:[%s1 + $0x50] sm:$0xff]
      %v381 = vld [vmem:[%s1 + $0x58] sm:$0xff]
      %v382 = vld [vmem:[%s1 + $0x60] sm:$0xff]
      %v383 = vld [vmem:[%s1 + $0x68] sm:$0xff]
      %v384 = vld [vmem:[%s1 + $0x70] sm:$0xff]
      %v385 = vld [vmem:[%s1 + $0x78] sm:$0xff]
      %v386 = vld [vmem:[%s2] sm:$0x1]
      %v388 = vlaneseq
      %v389 = vshrl.u32 %v388, 7
      %v390 = vsub.s32 0, %v389
      %v391 = vrot.slane %v386, %v390
      %393 = vmatprep.subr.mxu0 0.0
      %394 = vmatpush1.msra.mxu0 %v370
      %395 = vmatprep.subr.mxu0 0.0
      %396 = vmatpush1.msra.mxu0 %v371
      %397 = vmatprep.subr.mxu0 0.0
      %398 = vmatpush1.msra.mxu0 %v372
      %399 = vmatprep.subr.mxu0 0.0
      %400 = vmatpush1.msra.mxu0 %v373
      %401 = vmatprep.subr.mxu0 0.0
      %402 = vmatpush1.msra.mxu0 %v374
      %403 = vmatprep.subr.mxu0 0.0
      %404 = vmatpush1.msra.mxu0 %v375
      %405 = vmatprep.subr.mxu0 0.0
      %406 = vmatpush1.msra.mxu0 %v376
      %407 = vmatprep.subr.mxu0 0.0
      %408 = vmatpush1.msra.mxu0 %v377
      %409 = vmatprep.subr.mxu0 0.0
      %410 = vmatpush1.msra.mxu0 %v378
      %411 = vmatprep.subr.mxu0 0.0
      %412 = vmatpush1.msra.mxu0 %v379
      %413 = vmatprep.subr.mxu0 0.0
      %414 = vmatpush1.msra.mxu0 %v380
      %415 = vmatprep.subr.mxu0 0.0
      %416 = vmatpush1.msra.mxu0 %v381
      %417 = vmatprep.subr.mxu0 0.0
      %418 = vmatpush1.msra.mxu0 %v382
      %419 = vmatprep.subr.mxu0 0.0
      %420 = vmatpush1.msra.mxu0 %v383
      %421 = vmatprep.subr.mxu0 0.0
      %422 = vmatpush1.msra.mxu0 %v384
      %423 = vmatprep.subr.mxu0 0.0
      %424 = vmatpush1.msra.mxu0 %v385
      %425 = vmatprep.subr.mxu0 0.0
      %426 = vmatpush1.msra.mxu0 0.0
      %427 = vmatprep.subr.mxu0 0.0
      %428 = vmatpush1.msra.mxu0 0.0
      %429 = vmatprep.subr.mxu0 0.0
      %430 = vmatpush1.msra.mxu0 0.0
      %431 = vmatprep.subr.mxu0 0.0
      %432 = vmatpush1.msra.mxu0 0.0
      %433 = vmatprep.subr.mxu0 0.0
      %434 = vmatpush1.msra.mxu0 0.0
      %435 = vmatprep.subr.mxu0 0.0
      %436 = vmatpush1.msra.mxu0 0.0
      %437 = vmatprep.subr.mxu0 0.0
      %438 = vmatpush1.msra.mxu0 0.0
      %439 = vmatprep.subr.mxu0 0.0
      %440 = vmatpush1.msra.mxu0 0.0
      %441 = vmatprep.subr.mxu0 0.0
      %442 = vmatpush1.msra.mxu0 0.0
      %443 = vmatprep.subr.mxu0 0.0
      %444 = vmatpush1.msra.mxu0 0.0
      %445 = vmatprep.subr.mxu0 0.0
      %446 = vmatpush1.msra.mxu0 0.0
      %447 = vmatprep.subr.mxu0 0.0
      %448 = vmatpush1.msra.mxu0 0.0
      %449 = vmatprep.subr.mxu0 0.0
      %450 = vmatpush1.msra.mxu0 0.0
      %451 = vmatprep.subr.mxu0 0.0
      %452 = vmatpush1.msra.mxu0 0.0
      %453 = vmatprep.subr.mxu0 0.0
      %454 = vmatpush1.msra.mxu0 0.0
      %455 = vmatprep.subr.mxu0 0.0
      %456 = vmatpush1.msra.mxu0 0.0
      %457 = vmatprep.mubr.f32.mxu0 0.0
      %458 = vmatmul.mubr.f32.gmra.mrb[0].mxu0 %v354
      %v459 = vpop.f32.mrb[0].mxu0
      %v460 = vadd.f32 %v391, %v459
      %v461 = vpop.f32.mrb[0].mxu0
      %462 = vmatprep.mubr.f32.mxu0 0.0
      %463 = vmatmul.mubr.f32.gmra.mrb[0].mxu0 %v355
      %v464 = vpop.f32.mrb[0].mxu0
      %v465 = vadd.f32 %v391, %v464
      %v466 = vpop.f32.mrb[0].mxu0
      %467 = vmatprep.mubr.f32.mxu0 0.0
      %468 = vmatmul.mubr.f32.gmra.mrb[0].mxu0 %v356
      %v469 = vpop.f32.mrb[0].mxu0
      %v470 = vadd.f32 %v391, %v469
      %v471 = vpop.f32.mrb[0].mxu0
      %472 = vmatprep.mubr.f32.mxu0 0.0
      %473 = vmatmul.mubr.f32.gmra.mrb[0].mxu0 %v357
      %v474 = vpop.f32.mrb[0].mxu0
      %v475 = vadd.f32 %v391, %v474
      %v476 = vpop.f32.mrb[0].mxu0
      %477 = vmatprep.mubr.f32.mxu0 0.0
      %478 = vmatmul.mubr.f32.gmra.mrb[0].mxu0 %v358
      %v479 = vpop.f32.mrb[0].mxu0
      %v480 = vadd.f32 %v391, %v479
      %v481 = vpop.f32.mrb[0].mxu0
      %482 = vmatprep.mubr.f32.mxu0 0.0
      %483 = vmatmul.mubr.f32.gmra.mrb[0].mxu0 %v359
      %v484 = vpop.f32.mrb[0].mxu0
      %v485 = vadd.f32 %v391, %v484
      %v486 = vpop.f32.mrb[0].mxu0
      %487 = vmatprep.mubr.f32.mxu0 0.0
      %488 = vmatmul.mubr.f32.gmra.mrb[0].mxu0 %v360
      %v489 = vpop.f32.mrb[0].mxu0
      %v490 = vadd.f32 %v391, %v489
      %v491 = vpop.f32.mrb[0].mxu0
      %492 = vmatprep.mubr.f32.mxu0 0.0
      %493 = vmatmul.mubr.f32.gmra.mrb[0].mxu0 %v361
      %v494 = vpop.f32.mrb[0].mxu0
      %v495 = vadd.f32 %v391, %v494
      %v496 = vpop.f32.mrb[0].mxu0
      %497 = vmatprep.mubr.f32.mxu0 0.0
      %498 = vmatmul.mubr.f32.gmra.mrb[0].mxu0 %v362
      %v499 = vpop.f32.mrb[0].mxu0
      %v500 = vadd.f32 %v391, %v499
      %v501 = vpop.f32.mrb[0].mxu0
      %502 = vmatprep.mubr.f32.mxu0 0.0
      %503 = vmatmul.mubr.f32.gmra.mrb[0].mxu0 %v363
      %v504 = vpop.f32.mrb[0].mxu0
      %v505 = vadd.f32 %v391, %v504
      %v506 = vpop.f32.mrb[0].mxu0
      %507 = vmatprep.mubr.f32.mxu0 0.0
      %508 = vmatmul.mubr.f32.gmra.mrb[0].mxu0 %v364
      %v509 = vpop.f32.mrb[0].mxu0
      %v510 = vadd.f32 %v391, %v509
      %v511 = vpop.f32.mrb[0].mxu0
      %512 = vmatprep.mubr.f32.mxu0 0.0
      %513 = vmatmul.mubr.f32.gmra.mrb[0].mxu0 %v365
      %v514 = vpop.f32.mrb[0].mxu0
      %v515 = vadd.f32 %v391, %v514
      %v516 = vpop.f32.mrb[0].mxu0
      %517 = vmatprep.mubr.f32.mxu0 0.0
      %518 = vmatmul.mubr.f32.gmra.mrb[0].mxu0 %v366
      %v519 = vpop.f32.mrb[0].mxu0
      %v520 = vadd.f32 %v391, %v519
      %v521 = vpop.f32.mrb[0].mxu0
      %522 = vmatprep.mubr.f32.mxu0 0.0
      %523 = vmatmul.mubr.f32.gmra.mrb[0].mxu0 %v367
      %v524 = vpop.f32.mrb[0].mxu0
      %v525 = vadd.f32 %v391, %v524
      %v526 = vpop.f32.mrb[0].mxu0
      %527 = vmatprep.mubr.f32.mxu0 0.0
      %528 = vmatmul.mubr.f32.gmra.mrb[0].mxu0 %v368
      %v529 = vpop.f32.mrb[0].mxu0
      %v530 = vadd.f32 %v391, %v529
      %v531 = vpop.f32.mrb[0].mxu0
      %532 = vmatprep.mubr.f32.mxu0 0.0
      %533 = vmatmul.mubr.f32.gmra.mrb[0].mxu0 %v369
      %v534 = vpop.f32.mrb[0].mxu0
      %v535 = vadd.f32 %v391, %v534
      %v536 = vpop.f32.mrb[0].mxu0
      %537 = vdwg.mxu0
      %v538 = vtanh.pop %v460
      %v539 = vtanh.pop %v465
      %v540 = vtanh.pop %v470
      %v541 = vtanh.pop %v475
      %v542 = vtanh.pop %v480
      %v543 = vtanh.pop %v485
      %v544 = vtanh.pop %v490
      %v545 = vtanh.pop %v495
      %v546 = vtanh.pop %v500
      %v547 = vtanh.pop %v505
      %v548 = vtanh.pop %v510
      %v549 = vtanh.pop %v515
      %v550 = vtanh.pop %v520
      %v551 = vtanh.pop %v525
      %v552 = vtanh.pop %v530
      %v553 = vtanh.pop %v535
      %v554 = vld [vmem:[%s3] sm:$0xff]
      %v555 = vld [vmem:[%s3 + $0x8] sm:$0xff]
      %v556 = vld [vmem:[%s3 + $0x10] sm:$0xff]
      %v557 = vld [vmem:[%s3 + $0x18] sm:$0xff]
      %v558 = vld [vmem:[%s3 + $0x20] sm:$0xff]
      %v559 = vld [vmem:[%s3 + $0x28] sm:$0xff]
      %v560 = vld [vmem:[%s3 + $0x30] sm:$0xff]
      %v561 = vld [vmem:[%s3 + $0x38] sm:$0xff]
      %vm562 = vcmask 523264
      %v564 = vsel %vm562, %v538, 0
      %v567 = vsel %vm562, %v539, 0
      %v570 = vsel %vm562, %v540, 0
      %v573 = vsel %vm562, %v541, 0
      %v576 = vsel %vm562, %v542, 0
      %v579 = vsel %vm562, %v543, 0
      %v582 = vsel %vm562, %v544, 0
      %v585 = vsel %vm562, %v545, 0
      %v588 = vsel %vm562, %v546, 0
      %v591 = vsel %vm562, %v547, 0
      %v594 = vsel %vm562, %v548, 0
      %v597 = vsel %vm562, %v549, 0
      %v600 = vsel %vm562, %v550, 0
      %v603 = vsel %vm562, %v551, 0
      %v606 = vsel %vm562, %v552, 0
      %v609 = vsel %vm562, %v553, 0
      %611 = vmatprep.subr.mxu0 0.0
      %612 = vmatpush1.msra.mxu0 %v554
      %613 = vmatprep.subr.mxu0 0.0
      %614 = vmatpush1.msra.mxu0 %v555
      %615 = vmatprep.subr.mxu0 0.0
      %616 = vmatpush1.msra.mxu0 %v556
      %617 = vmatprep.subr.mxu0 0.0
      %618 = vmatpush1.msra.mxu0 %v557
      %619 = vmatprep.subr.mxu0 0.0
      %620 = vmatpush1.msra.mxu0 %v558
      %621 = vmatprep.subr.mxu0 0.0
      %622 = vmatpush1.msra.mxu0 %v559
      %623 = vmatprep.subr.mxu0 0.0
      %624 = vmatpush1.msra.mxu0 %v560
      %625 = vmatprep.subr.mxu0 0.0
      %626 = vmatpush1.msra.mxu0 %v561
      %627 = vmatprep.subr.mxu0 0.0
      %628 = vmatpush1.msra.mxu0 0.0
      %629 = vmatprep.subr.mxu0 0.0
      %630 = vmatpush1.msra.mxu0 0.0
      %631 = vmatprep.subr.mxu0 0.0
      %632 = vmatpush1.msra.mxu0 0.0
      %633 = vmatprep.subr.mxu0 0.0
      %634 = vmatpush1.msra.mxu0 0.0
      %635 = vmatprep.subr.mxu0 0.0
      %636 = vmatpush1.msra.mxu0 0.0
      %637 = vmatprep.subr.mxu0 0.0
      %638 = vmatpush1.msra.mxu0 0.0
      %639 = vmatprep.subr.mxu0 0.0
      %640 = vmatpush1.msra.mxu0 0.0
      %641 = vmatprep.subr.mxu0 0.0
      %642 = vmatpush1.msra.mxu0 0.0
      %643 = vmatprep.subr.mxu0 0.0
      %644 = vmatpush1.msra.mxu0 0.0
      %645 = vmatprep.subr.mxu0 0.0
      %646 = vmatpush1.msra.mxu0 0.0
      %647 = vmatprep.subr.mxu0 0.0
      %648 = vmatpush1.msra.mxu0 0.0
      %649 = vmatprep.subr.mxu0 0.0
      %650 = vmatpush1.msra.mxu0 0.0
      %651 = vmatprep.subr.mxu0 0.0
      %652 = vmatpush1.msra.mxu0 0.0
      %653 = vmatprep.subr.mxu0 0.0
      %654 = vmatpush1.msra.mxu0 0.0
      %655 = vmatprep.subr.mxu0 0.0
      %656 = vmatpush1.msra.mxu0 0.0
      %657 = vmatprep.subr.mxu0 0.0
      %658 = vmatpush1.msra.mxu0 0.0
      %659 = vmatprep.subr.mxu0 0.0
      %660 = vmatpush1.msra.mxu0 0.0
      %661 = vmatprep.subr.mxu0 0.0
      %662 = vmatpush1.msra.mxu0 0.0
      %663 = vmatprep.subr.mxu0 0.0
      %664 = vmatpush1.msra.mxu0 0.0
      %665 = vmatprep.subr.mxu0 0.0
      %666 = vmatpush1.msra.mxu0 0.0
      %667 = vmatprep.subr.mxu0 0.0
      %668 = vmatpush1.msra.mxu0 0.0
      %669 = vmatprep.subr.mxu0 0.0
      %670 = vmatpush1.msra.mxu0 0.0
      %671 = vmatprep.subr.mxu0 0.0
      %672 = vmatpush1.msra.mxu0 0.0
      %673 = vmatprep.subr.mxu0 0.0
      %674 = vmatpush1.msra.mxu0 0.0
      %675 = vmatprep.mubr.f32.mxu0 0.0
      %676 = vmatmul.mubr.f32.gmra.mrb[0].mxu0 %v564
      %v677 = vpop.f32.mrb[0].mxu0
      %v678 = vadd.f32 0.0, %v677
      %v679 = vpop.f32.mrb[0].mxu0
      %680 = vmatprep.mubr.f32.mxu0 0.0
      %681 = vmatmul.mubr.f32.gmra.mrb[0].mxu0 %v567
      %v682 = vpop.f32.mrb[0].mxu0
      %v683 = vadd.f32 0.0, %v682
      %v684 = vpop.f32.mrb[0].mxu0
      %685 = vmatprep.mubr.f32.mxu0 0.0
      %686 = vmatmul.mubr.f32.gmra.mrb[0].mxu0 %v570
      %v687 = vpop.f32.mrb[0].mxu0
      %v688 = vadd.f32 0.0, %v687
      %v689 = vpop.f32.mrb[0].mxu0
      %690 = vmatprep.mubr.f32.mxu0 0.0
      %691 = vmatmul.mubr.f32.gmra.mrb[0].mxu0 %v573
      %v692 = vpop.f32.mrb[0].mxu0
      %v693 = vadd.f32 0.0, %v692
      %v694 = vpop.f32.mrb[0].mxu0
      %695 = vmatprep.mubr.f32.mxu0 0.0
      %696 = vmatmul.mubr.f32.gmra.mrb[0].mxu0 %v576
      %v697 = vpop.f32.mrb[0].mxu0
      %v698 = vadd.f32 0.0, %v697
      %v699 = vpop.f32.mrb[0].mxu0
      %700 = vmatprep.mubr.f32.mxu0 0.0
      %701 = vmatmul.mubr.f32.gmra.mrb[0].mxu0 %v579
      %v702 = vpop.f32.mrb[0].mxu0
      %v703 = vadd.f32 0.0, %v702
      %v704 = vpop.f32.mrb[0].mxu0
      %705 = vmatprep.mubr.f32.mxu0 0.0
      %706 = vmatmul.mubr.f32.gmra.mrb[0].mxu0 %v582
      %v707 = vpop.f32.mrb[0].mxu0
      %v708 = vadd.f32 0.0, %v707
      %v709 = vpop.f32.mrb[0].mxu0
      %710 = vmatprep.mubr.f32.mxu0 0.0
      %711 = vmatmul.mubr.f32.gmra.mrb[0].mxu0 %v585
      %v712 = vpop.f32.mrb[0].mxu0
      %v713 = vadd.f32 0.0, %v712
      %v714 = vpop.f32.mrb[0].mxu0
      %715 = vmatprep.mubr.f32.mxu0 0.0
      %716 = vmatmul.mubr.f32.gmra.mrb[0].mxu0 %v588
      %v717 = vpop.f32.mrb[0].mxu0
      %v718 = vadd.f32 0.0, %v717
      %v719 = vpop.f32.mrb[0].mxu0
      %720 = vmatprep.mubr.f32.mxu0 0.0
      %721 = vmatmul.mubr.f32.gmra.mrb[0].mxu0 %v591
      %v722 = vpop.f32.mrb[0].mxu0
      %v723 = vadd.f32 0.0, %v722
      %v724 = vpop.f32.mrb[0].mxu0
      %725 = vmatprep.mubr.f32.mxu0 0.0
      %726 = vmatmul.mubr.f32.gmra.mrb[0].mxu0 %v594
      %v727 = vpop.f32.mrb[0].mxu0
      %v728 = vadd.f32 0.0, %v727
      %v729 = vpop.f32.mrb[0].mxu0
      %730 = vmatprep.mubr.f32.mxu0 0.0
      %731 = vmatmul.mubr.f32.gmra.mrb[0].mxu0 %v597
      %v732 = vpop.f32.mrb[0].mxu0
      %v733 = vadd.f32 0.0, %v732
      %v734 = vpop.f32.mrb[0].mxu0
      %735 = vmatprep.mubr.f32.mxu0 0.0
      %736 = vmatmul.mubr.f32.gmra.mrb[0].mxu0 %v600
      %v737 = vpop.f32.mrb[0].mxu0
      %v738 = vadd.f32 0.0, %v737
      %v739 = vpop.f32.mrb[0].mxu0
      %740 = vmatprep.mubr.f32.mxu0 0.0
      %741 = vmatmul.mubr.f32.gmra.mrb[0].mxu0 %v603
      %v742 = vpop.f32.mrb[0].mxu0
      %v743 = vadd.f32 0.0, %v742
      %v744 = vpop.f32.mrb[0].mxu0
      %745 = vmatprep.mubr.f32.mxu0 0.0
      %746 = vmatmul.mubr.f32.gmra.mrb[0].mxu0 %v606
      %v747 = vpop.f32.mrb[0].mxu0
      %v748 = vadd.f32 0.0, %v747
      %v749 = vpop.f32.mrb[0].mxu0
      %750 = vmatprep.mubr.f32.mxu0 0.0
      %751 = vmatmul.mubr.f32.gmra.mrb[0].mxu0 %v609
      %v752 = vpop.f32.mrb[0].mxu0
      %v753 = vadd.f32 0.0, %v752
      %v754 = vpop.f32.mrb[0].mxu0
      %755 = vdwg.mxu0
      %vm756 = vcmask 31744
      %v757 = vsel %vm756, %v678, -inf
      %758 = vmax.xlane.f32.xlu0 %v757
      %v759 = vpop.xlane.xlu0 %758
      %v760 = vsel %vm756, %v683, -inf
      %761 = vmax.xlane.f32.xlu0 %v760
      %v762 = vpop.xlane.xlu0 %761
      %v763 = vsel %vm756, %v688, -inf
      %764 = vmax.xlane.f32.xlu0 %v763
      %v765 = vpop.xlane.xlu0 %764
      %v766 = vsel %vm756, %v693, -inf
      %767 = vmax.xlane.f32.xlu0 %v766
      %v768 = vpop.xlane.xlu0 %767
      %v769 = vsel %vm756, %v698, -inf
      %770 = vmax.xlane.f32.xlu0 %v769
      %v771 = vpop.xlane.xlu0 %770
      %v772 = vsel %vm756, %v703, -inf
      %773 = vmax.xlane.f32.xlu0 %v772
      %v774 = vpop.xlane.xlu0 %773
      %v775 = vsel %vm756, %v708, -inf
      %776 = vmax.xlane.f32.xlu0 %v775
      %v777 = vpop.xlane.xlu0 %776
      %v778 = vsel %vm756, %v713, -inf
      %779 = vmax.xlane.f32.xlu0 %v778
      %v780 = vpop.xlane.xlu0 %779
      %v781 = vsel %vm756, %v718, -inf
      %782 = vmax.xlane.f32.xlu0 %v781
      %v783 = vpop.xlane.xlu0 %782
      %v784 = vsel %vm756, %v723, -inf
      %785 = vmax.xlane.f32.xlu0 %v784
      %v786 = vpop.xlane.xlu0 %785
      %v787 = vsel %vm756, %v728, -inf
      %788 = vmax.xlane.f32.xlu0 %v787
      %v789 = vpop.xlane.xlu0 %788
      %v790 = vsel %vm756, %v733, -inf
      %791 = vmax.xlane.f32.xlu0 %v790
      %v792 = vpop.xlane.xlu0 %791
      %v793 = vsel %vm756, %v738, -inf
      %794 = vmax.xlane.f32.xlu0 %v793
      %v795 = vpop.xlane.xlu0 %794
      %v796 = vsel %vm756, %v743, -inf
      %797 = vmax.xlane.f32.xlu0 %v796
      %v798 = vpop.xlane.xlu0 %797
      %v799 = vsel %vm756, %v748, -inf
      %800 = vmax.xlane.f32.xlu0 %v799
      %v801 = vpop.xlane.xlu0 %800
      %v802 = vsel %vm756, %v753, -inf
      %803 = vmax.xlane.f32.xlu0 %v802
      %v804 = vpop.xlane.xlu0 %803
      %v805 = vsub.f32 %v678, %v759
      %v806 = vsub.f32 %v683, %v762
      %v807 = vsub.f32 %v688, %v765
      %v808 = vsub.f32 %v693, %v768
      %v809 = vsub.f32 %v698, %v771
      %v810 = vsub.f32 %v703, %v774
      %v811 = vsub.f32 %v708, %v777
      %v812 = vsub.f32 %v713, %v780
      %v813 = vsub.f32 %v718, %v783
      %v814 = vsub.f32 %v723, %v786
      %v815 = vsub.f32 %v728, %v789
      %v816 = vsub.f32 %v733, %v792
      %v817 = vsub.f32 %v738, %v795
      %v818 = vsub.f32 %v743, %v798
      %v819 = vsub.f32 %v748, %v801
      %v820 = vsub.f32 %v753, %v804
      %v821 = vmul.f32 %v805, 1.442695
      %v822 = vpow.pop %v821
      %v823 = vmul.f32 %v806, 1.442695
      %v824 = vpow.pop %v823
      %v825 = vmul.f32 %v807, 1.442695
      %v826 = vpow.pop %v825
      %v827 = vmul.f32 %v808, 1.442695
      %v828 = vpow.pop %v827
      %v829 = vmul.f32 %v809, 1.442695
      %v830 = vpow.pop %v829
      %v831 = vmul.f32 %v810, 1.442695
      %v832 = vpow.pop %v831
      %v833 = vmul.f32 %v811, 1.442695
      %v834 = vpow.pop %v833
      %v835 = vmul.f32 %v812, 1.442695
      %v836 = vpow.pop %v835
      %v837 = vmul.f32 %v813, 1.442695
      %v838 = vpow.pop %v837
      %v839 = vmul.f32 %v814, 1.442695
      %v840 = vpow.pop %v839
      %v841 = vmul.f32 %v815, 1.442695
      %v842 = vpow.pop %v841
      %v843 = vmul.f32 %v816, 1.442695
      %v844 = vpow.pop %v843
      %v845 = vmul.f32 %v817, 1.442695
      %v846 = vpow.pop %v845
      %v847 = vmul.f32 %v818, 1.442695
      %v848 = vpow.pop %v847
      %v849 = vmul.f32 %v819, 1.442695
      %v850 = vpow.pop %v849
      %v851 = vmul.f32 %v820, 1.442695
      %v852 = vpow.pop %v851
      %v853 = vsel %vm756, %v822, 0.0
      %854 = vadd.xlane.f32.xlu0 %v853
      %v855 = vpop.xlane.xlu0 %854
      %v856 = vsel %vm756, %v824, 0.0
      %857 = vadd.xlane.f32.xlu0 %v856
      %v858 = vpop.xlane.xlu0 %857
      %v859 = vsel %vm756, %v826, 0.0
      %860 = vadd.xlane.f32.xlu0 %v859
      %v861 = vpop.xlane.xlu0 %860
      %v862 = vsel %vm756, %v828, 0.0
      %863 = vadd.xlane.f32.xlu0 %v862
      %v864 = vpop.xlane.xlu0 %863
      %v865 = vsel %vm756, %v830, 0.0
      %866 = vadd.xlane.f32.xlu0 %v865
      %v867 = vpop.xlane.xlu0 %866
      %v868 = vsel %vm756, %v832, 0.0
      %869 = vadd.xlane.f32.xlu0 %v868
      %v870 = vpop.xlane.xlu0 %869
      %v871 = vsel %vm756, %v834, 0.0
      %872 = vadd.xlane.f32.xlu0 %v871
      %v873 = vpop.xlane.xlu0 %872
      %v874 = vsel %vm756, %v836, 0.0
      %875 = vadd.xlane.f32.xlu0 %v874
      %v876 = vpop.xlane.xlu0 %875
      %v877 = vsel %vm756, %v838, 0.0
      %878 = vadd.xlane.f32.xlu0 %v877
      %v879 = vpop.xlane.xlu0 %878
      %v880 = vsel %vm756, %v840, 0.0
      %881 = vadd.xlane.f32.xlu0 %v880
      %v882 = vpop.xlane.xlu0 %881
      %v883 = vsel %vm756, %v842, 0.0
      %884 = vadd.xlane.f32.xlu0 %v883
      %v885 = vpop.xlane.xlu0 %884
      %v886 = vsel %vm756, %v844, 0.0
      %887 = vadd.xlane.f32.xlu0 %v886
      %v888 = vpop.xlane.xlu0 %887
      %v889 = vsel %vm756, %v846, 0.0
      %890 = vadd.xlane.f32.xlu0 %v889
      %v891 = vpop.xlane.xlu0 %890
      %v892 = vsel %vm756, %v848, 0.0
      %893 = vadd.xlane.f32.xlu0 %v892
      %v894 = vpop.xlane.xlu0 %893
      %v895 = vsel %vm756, %v850, 0.0
      %896 = vadd.xlane.f32.xlu0 %v895
      %v897 = vpop.xlane.xlu0 %896
      %v898 = vsel %vm756, %v852, 0.0
      %899 = vadd.xlane.f32.xlu0 %v898
      %v900 = vpop.xlane.xlu0 %899
      %v901 = vrcp.pop %v855
      %v902 = vmul.f32 %v822, %v901
      %v903 = vrcp.pop %v858
      %v904 = vmul.f32 %v824, %v903
      %v905 = vrcp.pop %v861
      %v906 = vmul.f32 %v826, %v905
      %v907 = vrcp.pop %v864
      %v908 = vmul.f32 %v828, %v907
      %v909 = vrcp.pop %v867
      %v910 = vmul.f32 %v830, %v909
      %v911 = vrcp.pop %v870
      %v912 = vmul.f32 %v832, %v911
      %v913 = vrcp.pop %v873
      %v914 = vmul.f32 %v834, %v913
      %v915 = vrcp.pop %v876
      %v916 = vmul.f32 %v836, %v915
      %v917 = vrcp.pop %v879
      %v918 = vmul.f32 %v838, %v917
      %v919 = vrcp.pop %v882
      %v920 = vmul.f32 %v840, %v919
      %v921 = vrcp.pop %v885
      %v922 = vmul.f32 %v842, %v921
      %v923 = vrcp.pop %v888
      %v924 = vmul.f32 %v844, %v923
      %v925 = vrcp.pop %v891
      %v926 = vmul.f32 %v846, %v925
      %v927 = vrcp.pop %v894
      %v928 = vmul.f32 %v848, %v927
      %v929 = vrcp.pop %v897
      %v930 = vmul.f32 %v850, %v929
      %v931 = vrcp.pop %v900
      %v932 = vmul.f32 %v852, %v931
      %v933 = vld [vmem:[%s4] sm:$0xf]
      %v935 = vsel %vm756, %v902, 0
      %v938 = vsel %vm756, %v904, 0
      %v941 = vsel %vm756, %v906, 0
      %v944 = vsel %vm756, %v908, 0
      %v947 = vsel %vm756, %v910, 0
      %v950 = vsel %vm756, %v912, 0
      %v953 = vsel %vm756, %v914, 0
      %v956 = vsel %vm756, %v916, 0
      %v959 = vsel %vm756, %v918, 0
      %v962 = vsel %vm756, %v920, 0
      %v965 = vsel %vm756, %v922, 0
      %v968 = vsel %vm756, %v924, 0
      %v971 = vsel %vm756, %v926, 0
      %v974 = vsel %vm756, %v928, 0
      %v977 = vsel %vm756, %v930, 0
      %v980 = vsel %vm756, %v932, 0
      %vm982 = vcmask 1043456
      %v984 = vsel %vm982, %v933, 0
      %986 = vmatprep.subr.mxu0 0.0
      %987 = vmatpush1.msra.mxu0 %v984
      %988 = vmatprep.subr.mxu0 0.0
      %989 = vmatpush1.msra.mxu0 0.0
      %990 = vmatprep.subr.mxu0 0.0
      %991 = vmatpush1.msra.mxu0 0.0
      %992 = vmatprep.subr.mxu0 0.0
      %993 = vmatpush1.msra.mxu0 0.0
      %994 = vmatprep.subr.mxu0 0.0
      %995 = vmatpush1.msra.mxu0 0.0
      %996 = vmatprep.subr.mxu0 0.0
      %997 = vmatpush1.msra.mxu0 0.0
      %998 = vmatprep.subr.mxu0 0.0
      %999 = vmatpush1.msra.mxu0 0.0
      %1000 = vmatprep.subr.mxu0 0.0
      %1001 = vmatpush1.msra.mxu0 0.0
      %1002 = vmatprep.subr.mxu0 0.0
      %1003 = vmatpush1.msra.mxu0 0.0
      %1004 = vmatprep.subr.mxu0 0.0
      %1005 = vmatpush1.msra.mxu0 0.0
      %1006 = vmatprep.subr.mxu0 0.0
      %1007 = vmatpush1.msra.mxu0 0.0
      %1008 = vmatprep.subr.mxu0 0.0
      %1009 = vmatpush1.msra.mxu0 0.0
      %1010 = vmatprep.subr.mxu0 0.0
      %1011 = vmatpush1.msra.mxu0 0.0
      %1012 = vmatprep.subr.mxu0 0.0
      %1013 = vmatpush1.msra.mxu0 0.0
      %1014 = vmatprep.subr.mxu0 0.0
      %1015 = vmatpush1.msra.mxu0 0.0
      %1016 = vmatprep.subr.mxu0 0.0
      %1017 = vmatpush1.msra.mxu0 0.0
      %1018 = vmatprep.subr.mxu0 0.0
      %1019 = vmatpush1.msra.mxu0 0.0
      %1020 = vmatprep.subr.mxu0 0.0
      %1021 = vmatpush1.msra.mxu0 0.0
      %1022 = vmatprep.subr.mxu0 0.0
      %1023 = vmatpush1.msra.mxu0 0.0
      %1024 = vmatprep.subr.mxu0 0.0
      %1025 = vmatpush1.msra.mxu0 0.0
      %1026 = vmatprep.subr.mxu0 0.0
      %1027 = vmatpush1.msra.mxu0 0.0
      %1028 = vmatprep.subr.mxu0 0.0
      %1029 = vmatpush1.msra.mxu0 0.0
      %1030 = vmatprep.subr.mxu0 0.0
      %1031 = vmatpush1.msra.mxu0 0.0
      %1032 = vmatprep.subr.mxu0 0.0
      %1033 = vmatpush1.msra.mxu0 0.0
      %1034 = vmatprep.subr.mxu0 0.0
      %1035 = vmatpush1.msra.mxu0 0.0
      %1036 = vmatprep.subr.mxu0 0.0
      %1037 = vmatpush1.msra.mxu0 0.0
      %1038 = vmatprep.subr.mxu0 0.0
      %1039 = vmatpush1.msra.mxu0 0.0
      %1040 = vmatprep.subr.mxu0 0.0
      %1041 = vmatpush1.msra.mxu0 0.0
      %1042 = vmatprep.subr.mxu0 0.0
      %1043 = vmatpush1.msra.mxu0 0.0
      %1044 = vmatprep.subr.mxu0 0.0
      %1045 = vmatpush1.msra.mxu0 0.0
      %1046 = vmatprep.subr.mxu0 0.0
      %1047 = vmatpush1.msra.mxu0 0.0
      %1048 = vmatprep.subr.mxu0 0.0
      %1049 = vmatpush1.msra.mxu0 0.0
      %1050 = vmatprep.mubr.f32.mxu0 0.0
      %1051 = vmatmul.mubr.f32.gmra.mrb[0].mxu0 %v935
      %v1052 = vpop.f32.mrb[0].mxu0
      %v1053 = vadd.f32 0.0, %v1052
      %v1054 = vpop.f32.mrb[0].mxu0
      %1055 = vmatprep.mubr.f32.mxu0 0.0
      %1056 = vmatmul.mubr.f32.gmra.mrb[0].mxu0 %v938
      %v1057 = vpop.f32.mrb[0].mxu0
      %v1058 = vadd.f32 0.0, %v1057
      %v1059 = vpop.f32.mrb[0].mxu0
      %1060 = vmatprep.mubr.f32.mxu0 0.0
      %1061 = vmatmul.mubr.f32.gmra.mrb[0].mxu0 %v941
      %v1062 = vpop.f32.mrb[0].mxu0
      %v1063 = vadd.f32 0.0, %v1062
      %v1064 = vpop.f32.mrb[0].mxu0
      %1065 = vmatprep.mubr.f32.mxu0 0.0
      %1066 = vmatmul.mubr.f32.gmra.mrb[0].mxu0 %v944
      %v1067 = vpop.f32.mrb[0].mxu0
      %v1068 = vadd.f32 0.0, %v1067
      %v1069 = vpop.f32.mrb[0].mxu0
      %1070 = vmatprep.mubr.f32.mxu0 0.0
      %1071 = vmatmul.mubr.f32.gmra.mrb[0].mxu0 %v947
      %v1072 = vpop.f32.mrb[0].mxu0
      %v1073 = vadd.f32 0.0, %v1072
      %v1074 = vpop.f32.mrb[0].mxu0
      %1075 = vmatprep.mubr.f32.mxu0 0.0
      %1076 = vmatmul.mubr.f32.gmra.mrb[0].mxu0 %v950
      %v1077 = vpop.f32.mrb[0].mxu0
      %v1078 = vadd.f32 0.0, %v1077
      %v1079 = vpop.f32.mrb[0].mxu0
      %1080 = vmatprep.mubr.f32.mxu0 0.0
      %1081 = vmatmul.mubr.f32.gmra.mrb[0].mxu0 %v953
      %v1082 = vpop.f32.mrb[0].mxu0
      %v1083 = vadd.f32 0.0, %v1082
      %v1084 = vpop.f32.mrb[0].mxu0
      %1085 = vmatprep.mubr.f32.mxu0 0.0
      %1086 = vmatmul.mubr.f32.gmra.mrb[0].mxu0 %v956
      %v1087 = vpop.f32.mrb[0].mxu0
      %v1088 = vadd.f32 0.0, %v1087
      %v1089 = vpop.f32.mrb[0].mxu0
      %1090 = vmatprep.mubr.f32.mxu0 0.0
      %1091 = vmatmul.mubr.f32.gmra.mrb[0].mxu0 %v959
      %v1092 = vpop.f32.mrb[0].mxu0
      %v1093 = vadd.f32 0.0, %v1092
      %v1094 = vpop.f32.mrb[0].mxu0
      %1095 = vmatprep.mubr.f32.mxu0 0.0
      %1096 = vmatmul.mubr.f32.gmra.mrb[0].mxu0 %v962
      %v1097 = vpop.f32.mrb[0].mxu0
      %v1098 = vadd.f32 0.0, %v1097
      %v1099 = vpop.f32.mrb[0].mxu0
      %1100 = vmatprep.mubr.f32.mxu0 0.0
      %1101 = vmatmul.mubr.f32.gmra.mrb[0].mxu0 %v965
      %v1102 = vpop.f32.mrb[0].mxu0
      %v1103 = vadd.f32 0.0, %v1102
      %v1104 = vpop.f32.mrb[0].mxu0
      %1105 = vmatprep.mubr.f32.mxu0 0.0
      %1106 = vmatmul.mubr.f32.gmra.mrb[0].mxu0 %v968
      %v1107 = vpop.f32.mrb[0].mxu0
      %v1108 = vadd.f32 0.0, %v1107
      %v1109 = vpop.f32.mrb[0].mxu0
      %1110 = vmatprep.mubr.f32.mxu0 0.0
      %1111 = vmatmul.mubr.f32.gmra.mrb[0].mxu0 %v971
      %v1112 = vpop.f32.mrb[0].mxu0
      %v1113 = vadd.f32 0.0, %v1112
      %v1114 = vpop.f32.mrb[0].mxu0
      %1115 = vmatprep.mubr.f32.mxu0 0.0
      %1116 = vmatmul.mubr.f32.gmra.mrb[0].mxu0 %v974
      %v1117 = vpop.f32.mrb[0].mxu0
      %v1118 = vadd.f32 0.0, %v1117
      %v1119 = vpop.f32.mrb[0].mxu0
      %1120 = vmatprep.mubr.f32.mxu0 0.0
      %1121 = vmatmul.mubr.f32.gmra.mrb[0].mxu0 %v977
      %v1122 = vpop.f32.mrb[0].mxu0
      %v1123 = vadd.f32 0.0, %v1122
      %v1124 = vpop.f32.mrb[0].mxu0
      %1125 = vmatprep.mubr.f32.mxu0 0.0
      %1126 = vmatmul.mubr.f32.gmra.mrb[0].mxu0 %v980
      %v1127 = vpop.f32.mrb[0].mxu0
      %v1128 = vadd.f32 0.0, %v1127
      %v1129 = vpop.f32.mrb[0].mxu0
      %1130 = vdwg.mxu0
      %v1131 = vmul.f32 %v354, %v1053
      %v1132 = vmul.f32 %v355, %v1058
      %v1133 = vmul.f32 %v356, %v1063
      %v1134 = vmul.f32 %v357, %v1068
      %v1135 = vmul.f32 %v358, %v1073
      %v1136 = vmul.f32 %v359, %v1078
      %v1137 = vmul.f32 %v360, %v1083
      %v1138 = vmul.f32 %v361, %v1088
      %v1139 = vmul.f32 %v362, %v1093
      %v1140 = vmul.f32 %v363, %v1098
      %v1141 = vmul.f32 %v364, %v1103
      %v1142 = vmul.f32 %v365, %v1108
      %v1143 = vmul.f32 %v366, %v1113
      %v1144 = vmul.f32 %v367, %v1118
      %v1145 = vmul.f32 %v368, %v1123
      %v1146 = vmul.f32 %v369, %v1128
      %v1147 = vld [vmem:[%s5] sm:$0xff]
      %v1148 = vld [vmem:[%s5 + $0x8] sm:$0xff]
      %v1149 = vld [vmem:[%s5 + $0x10] sm:$0xff]
      %v1150 = vld [vmem:[%s5 + $0x18] sm:$0xff]
      %v1151 = vld [vmem:[%s5 + $0x20] sm:$0xff]
      %v1152 = vld [vmem:[%s5 + $0x28] sm:$0xff]
      %v1153 = vld [vmem:[%s5 + $0x30] sm:$0xff]
      %v1154 = vld [vmem:[%s5 + $0x38] sm:$0xff]
      %v1155 = vld [vmem:[%s5 + $0x40] sm:$0xff]
      %v1156 = vld [vmem:[%s5 + $0x48] sm:$0xff]
      %v1157 = vld [vmem:[%s5 + $0x50] sm:$0xff]
      %v1158 = vld [vmem:[%s5 + $0x58] sm:$0xff]
      %v1159 = vld [vmem:[%s5 + $0x60] sm:$0xff]
      %v1160 = vld [vmem:[%s5 + $0x68] sm:$0xff]
      %v1161 = vld [vmem:[%s5 + $0x70] sm:$0xff]
      %v1162 = vld [vmem:[%s5 + $0x78] sm:$0xff]
      %1163 = vmatprep.subr.mxu0 0.0
      %1164 = vmatpush1.msra.mxu0 %v1147
      %1165 = vmatprep.subr.mxu0 0.0
      %1166 = vmatpush1.msra.mxu0 %v1148
      %1167 = vmatprep.subr.mxu0 0.0
      %1168 = vmatpush1.msra.mxu0 %v1149
      %1169 = vmatprep.subr.mxu0 0.0
      %1170 = vmatpush1.msra.mxu0 %v1150
      %1171 = vmatprep.subr.mxu0 0.0
      %1172 = vmatpush1.msra.mxu0 %v1151
      %1173 = vmatprep.subr.mxu0 0.0
      %1174 = vmatpush1.msra.mxu0 %v1152
      %1175 = vmatprep.subr.mxu0 0.0
      %1176 = vmatpush1.msra.mxu0 %v1153
      %1177 = vmatprep.subr.mxu0 0.0
      %1178 = vmatpush1.msra.mxu0 %v1154
      %1179 = vmatprep.subr.mxu0 0.0
      %1180 = vmatpush1.msra.mxu0 %v1155
      %1181 = vmatprep.subr.mxu0 0.0
      %1182 = vmatpush1.msra.mxu0 %v1156
      %1183 = vmatprep.subr.mxu0 0.0
      %1184 = vmatpush1.msra.mxu0 %v1157
      %1185 = vmatprep.subr.mxu0 0.0
      %1186 = vmatpush1.msra.mxu0 %v1158
      %1187 = vmatprep.subr.mxu0 0.0
      %1188 = vmatpush1.msra.mxu0 %v1159
      %1189 = vmatprep.subr.mxu0 0.0
      %1190 = vmatpush1.msra.mxu0 %v1160
      %1191 = vmatprep.subr.mxu0 0.0
      %1192 = vmatpush1.msra.mxu0 %v1161
      %1193 = vmatprep.subr.mxu0 0.0
      %1194 = vmatpush1.msra.mxu0 %v1162
      %1195 = vmatprep.subr.mxu0 0.0
      %1196 = vmatpush1.msra.mxu0 0.0
      %1197 = vmatprep.subr.mxu0 0.0
      %1198 = vmatpush1.msra.mxu0 0.0
      %1199 = vmatprep.subr.mxu0 0.0
      %1200 = vmatpush1.msra.mxu0 0.0
      %1201 = vmatprep.subr.mxu0 0.0
      %1202 = vmatpush1.msra.mxu0 0.0
      %1203 = vmatprep.subr.mxu0 0.0
      %1204 = vmatpush1.msra.mxu0 0.0
      %1205 = vmatprep.subr.mxu0 0.0
      %1206 = vmatpush1.msra.mxu0 0.0
      %1207 = vmatprep.subr.mxu0 0.0
      %1208 = vmatpush1.msra.mxu0 0.0
      %1209 = vmatprep.subr.mxu0 0.0
      %1210 = vmatpush1.msra.mxu0 0.0
      %1211 = vmatprep.subr.mxu0 0.0
      %1212 = vmatpush1.msra.mxu0 0.0
      %1213 = vmatprep.subr.mxu0 0.0
      %1214 = vmatpush1.msra.mxu0 0.0
      %1215 = vmatprep.subr.mxu0 0.0
      %1216 = vmatpush1.msra.mxu0 0.0
      %1217 = vmatprep.subr.mxu0 0.0
      %1218 = vmatpush1.msra.mxu0 0.0
      %1219 = vmatprep.subr.mxu0 0.0
      %1220 = vmatpush1.msra.mxu0 0.0
      %1221 = vmatprep.subr.mxu0 0.0
      %1222 = vmatpush1.msra.mxu0 0.0
      %1223 = vmatprep.subr.mxu0 0.0
      %1224 = vmatpush1.msra.mxu0 0.0
      %1225 = vmatprep.subr.mxu0 0.0
      %1226 = vmatpush1.msra.mxu0 0.0
      %1227 = vmatprep.mubr.f32.mxu0 0.0
      %1228 = vmatmul.mubr.f32.gmra.mrb[0].mxu0 %v1131
      %v1229 = vpop.f32.mrb[0].mxu0
      %v1230 = vadd.f32 0.0, %v1229
      %v1231 = vpop.f32.mrb[0].mxu0
      %1232 = vmatprep.mubr.f32.mxu0 0.0
      %1233 = vmatmul.mubr.f32.gmra.mrb[0].mxu0 %v1132
      %v1234 = vpop.f32.mrb[0].mxu0
      %v1235 = vadd.f32 0.0, %v1234
      %v1236 = vpop.f32.mrb[0].mxu0
      %1237 = vmatprep.mubr.f32.mxu0 0.0
      %1238 = vmatmul.mubr.f32.gmra.mrb[0].mxu0 %v1133
      %v1239 = vpop.f32.mrb[0].mxu0
      %v1240 = vadd.f32 0.0, %v1239
      %v1241 = vpop.f32.mrb[0].mxu0
      %1242 = vmatprep.mubr.f32.mxu0 0.0
      %1243 = vmatmul.mubr.f32.gmra.mrb[0].mxu0 %v1134
      %v1244 = vpop.f32.mrb[0].mxu0
      %v1245 = vadd.f32 0.0, %v1244
      %v1246 = vpop.f32.mrb[0].mxu0
      %1247 = vmatprep.mubr.f32.mxu0 0.0
      %1248 = vmatmul.mubr.f32.gmra.mrb[0].mxu0 %v1135
      %v1249 = vpop.f32.mrb[0].mxu0
      %v1250 = vadd.f32 0.0, %v1249
      %v1251 = vpop.f32.mrb[0].mxu0
      %1252 = vmatprep.mubr.f32.mxu0 0.0
      %1253 = vmatmul.mubr.f32.gmra.mrb[0].mxu0 %v1136
      %v1254 = vpop.f32.mrb[0].mxu0
      %v1255 = vadd.f32 0.0, %v1254
      %v1256 = vpop.f32.mrb[0].mxu0
      %1257 = vmatprep.mubr.f32.mxu0 0.0
      %1258 = vmatmul.mubr.f32.gmra.mrb[0].mxu0 %v1137
      %v1259 = vpop.f32.mrb[0].mxu0
      %v1260 = vadd.f32 0.0, %v1259
      %v1261 = vpop.f32.mrb[0].mxu0
      %1262 = vmatprep.mubr.f32.mxu0 0.0
      %1263 = vmatmul.mubr.f32.gmra.mrb[0].mxu0 %v1138
      %v1264 = vpop.f32.mrb[0].mxu0
      %v1265 = vadd.f32 0.0, %v1264
      %v1266 = vpop.f32.mrb[0].mxu0
      %1267 = vmatprep.mubr.f32.mxu0 0.0
      %1268 = vmatmul.mubr.f32.gmra.mrb[0].mxu0 %v1139
      %v1269 = vpop.f32.mrb[0].mxu0
      %v1270 = vadd.f32 0.0, %v1269
      %v1271 = vpop.f32.mrb[0].mxu0
      %1272 = vmatprep.mubr.f32.mxu0 0.0
      %1273 = vmatmul.mubr.f32.gmra.mrb[0].mxu0 %v1140
      %v1274 = vpop.f32.mrb[0].mxu0
      %v1275 = vadd.f32 0.0, %v1274
      %v1276 = vpop.f32.mrb[0].mxu0
      %1277 = vmatprep.mubr.f32.mxu0 0.0
      %1278 = vmatmul.mubr.f32.gmra.mrb[0].mxu0 %v1141
      %v1279 = vpop.f32.mrb[0].mxu0
      %v1280 = vadd.f32 0.0, %v1279
      %v1281 = vpop.f32.mrb[0].mxu0
      %1282 = vmatprep.mubr.f32.mxu0 0.0
      %1283 = vmatmul.mubr.f32.gmra.mrb[0].mxu0 %v1142
      %v1284 = vpop.f32.mrb[0].mxu0
      %v1285 = vadd.f32 0.0, %v1284
      %v1286 = vpop.f32.mrb[0].mxu0
      %1287 = vmatprep.mubr.f32.mxu0 0.0
      %1288 = vmatmul.mubr.f32.gmra.mrb[0].mxu0 %v1143
      %v1289 = vpop.f32.mrb[0].mxu0
      %v1290 = vadd.f32 0.0, %v1289
      %v1291 = vpop.f32.mrb[0].mxu0
      %1292 = vmatprep.mubr.f32.mxu0 0.0
      %1293 = vmatmul.mubr.f32.gmra.mrb[0].mxu0 %v1144
      %v1294 = vpop.f32.mrb[0].mxu0
      %v1295 = vadd.f32 0.0, %v1294
      %v1296 = vpop.f32.mrb[0].mxu0
      %1297 = vmatprep.mubr.f32.mxu0 0.0
      %1298 = vmatmul.mubr.f32.gmra.mrb[0].mxu0 %v1145
      %v1299 = vpop.f32.mrb[0].mxu0
      %v1300 = vadd.f32 0.0, %v1299
      %v1301 = vpop.f32.mrb[0].mxu0
      %1302 = vmatprep.mubr.f32.mxu0 0.0
      %1303 = vmatmul.mubr.f32.gmra.mrb[0].mxu0 %v1146
      %v1304 = vpop.f32.mrb[0].mxu0
      %v1305 = vadd.f32 0.0, %v1304
      %v1306 = vpop.f32.mrb[0].mxu0
      %1307 = vdwg.mxu0
      %vm1308 = vcmask 261120
      %1309 = vst.msk [vmem:[%s253] sm:$0xff] %vm1308, %v1230
      %1310 = vst.msk [vmem:[%s253 + $0x8] sm:$0xff] %vm1308, %v1235
      %1311 = vst.msk [vmem:[%s253 + $0x10] sm:$0xff] %vm1308, %v1240
      %1312 = vst.msk [vmem:[%s253 + $0x18] sm:$0xff] %vm1308, %v1245
      %1313 = vst.msk [vmem:[%s253 + $0x20] sm:$0xff] %vm1308, %v1250
      %1314 = vst.msk [vmem:[%s253 + $0x28] sm:$0xff] %vm1308, %v1255
      %1315 = vst.msk [vmem:[%s253 + $0x30] sm:$0xff] %vm1308, %v1260
      %1316 = vst.msk [vmem:[%s253 + $0x38] sm:$0xff] %vm1308, %v1265
      %1317 = vst.msk [vmem:[%s253 + $0x40] sm:$0xff] %vm1308, %v1270
      %1318 = vst.msk [vmem:[%s253 + $0x48] sm:$0xff] %vm1308, %v1275
      %1319 = vst.msk [vmem:[%s253 + $0x50] sm:$0xff] %vm1308, %v1280
      %1320 = vst.msk [vmem:[%s253 + $0x58] sm:$0xff] %vm1308, %v1285
      %1321 = vst.msk [vmem:[%s253 + $0x60] sm:$0xff] %vm1308, %v1290
      %1322 = vst.msk [vmem:[%s253 + $0x68] sm:$0xff] %vm1308, %v1295
      %1323 = vst.msk [vmem:[%s253 + $0x70] sm:$0xff] %vm1308, %v1300
      %1324 = vst.msk [vmem:[%s253 + $0x78] sm:$0xff] %vm1308, %v1305
      %s1325 = smul.u32 16, %s17
      %p1326 = scmp.lt.s32.totalorder %s1325, 31
      %s1327 = scalar_select %p1326, %s1325, 31
      %s1328 = smul.addr %s1327, 8
      %s1329 = scalar_lea.vmem %s6, %s1328
      // Predicated region
      $region45: #{semantic_attention.1} parent=43 // pred_check
        %p1330 = pneg %p166
      $region46: #{semantic_attention.1} parent=43 // pred_check_branch
        %1332 = sbr.rel (%p1330) target = $region48
      $region47: #{semantic_attention.1} parent=43 // pred_region
        %s1333 = smul.u32 16, %s17
      $region48: #{semantic_attention.1} parent=43 // pred_fallthru
        _
    $region44: #{semantic_attention.1} parent=5 // pred_fallthru
      _
    %p1334 = scmp.le.s32.totalorder 2, %s12
    // Predicated region
    $region49: #{semantic_attention.1} parent=5 // pred_check
      %p1335 = pneg %p1334
    $region50: #{semantic_attention.1} parent=5 // pred_check_branch
      %1337 = sbr.rel (%p1335) target = $region52
    $region51: #{semantic_attention.1} parent=5 // pred_region
      %s1338 = ssub.s32 %s12, 2
      // Predicated region
      $region53: #{semantic_attention.1} parent=51 // pred_check
        %p1339 = pneg %p172
      $region54: #{semantic_attention.1} parent=51 // pred_check_branch
        %1341 = sbr.rel (%p1339) target = $region56
      $region55: #{semantic_attention.1} parent=51 // pred_region
        %s1342 = smul.u32 16, %s18
        %p1343 = scmp.lt.s32.totalorder %s1342, 31
        %s1344 = scalar_select %p1343, %s1342, 31
        %s1345 = smul.addr %s1344, 8
        %s1346 = scalar_lea.vmem %s6, %s1345
      $region56: #{semantic_attention.1} parent=51 // pred_fallthru
        _
    $region52: #{semantic_attention.1} parent=5 // pred_fallthru
      _
  $region6: #{semantic_attention.1} parent=0 // loop_footer
    %s16 = sadd.s32 1, %s12
  $region7: #{semantic_attention.1} parent=0 // loop_footer_branch
    %11 = sbr.rel target = $region3
  $region8: #{semantic_attention.1} parent=0 // loop_exit
    _

</llo_original>
